<compile_context>
chip_gen: v5e
topology: v5e:2x2
jax: 0.10.0
libtpu: 0.0.40
codegen_flags: <defaults>
</compile_context>

<pallas_src>
import jax
import jax.numpy as jnp
from jax import lax
from jax.experimental import pallas as pl
from jax.experimental.pallas import tpu as pltpu


def _round_up(x: int, m: int) -> int:
    return ((x + m - 1) // m) * m


def _abs_pow(s, p: float):
    """|s| ** p, specialized to VPU multiplies for small integer exponents."""
    if p == 2.0:
        return s * s
    if p == 1.0:
        return jnp.abs(s)
    if p == float(int(p)) and 1.0 <= p <= 8.0:
        a = jnp.abs(s)
        e = a
        for _ in range(int(p) - 1):
            e = e * a
        return e
    return jnp.abs(s) ** p  # non-integer exponent: EUP fallback


def _log_softmax(s, n_classes: int, c_pad: int):
    """Row-wise log_softmax; padded class lanes are excluded from the LSE."""
    if c_pad != n_classes:
        col = lax.broadcasted_iota(jnp.int32, s.shape, 1)
        z_in = jnp.where(col < n_classes, s, jnp.float32(-1e30))
    else:
        z_in = s
    m = jnp.max(z_in, axis=1, keepdims=True)
    z = z_in - m
    lse = jnp.log(jnp.sum(jnp.exp(z), axis=1, keepdims=True))
    return z - lse  # finite everywhere (padded lanes ~ -1e30)


def _write_partials(out_ref, nll_part, gls_part):
    """Lane-dense (1, 8, 128) block: [0,0,0]=nll sum, [0,0,1]=gls sum."""
    lane = lax.broadcasted_iota(jnp.int32, (1, 8, 128), 2)
    sub = lax.broadcasted_iota(jnp.int32, (1, 8, 128), 1)
    out_ref[...] = jnp.where(
        jnp.logical_and(sub == 0, lane == 0), nll_part,
        jnp.where(jnp.logical_and(sub == 0, lane == 1), gls_part,
                  jnp.float32(0.0)))


def _make_kernel_resident_rt(n_classes: int, c_pad: int, exponent: float):
    """One-hot MXU select against a VMEM-resident R^T."""
    p = float(exponent)

    def kernel(tgt_ref, scores_ref, rT_ref, out_ref):
        s = scores_ref[...].astype(jnp.float32)            # (tn, c_pad)
        log_p = _log_softmax(s, n_classes, c_pad)

        # g[i, :] = R^T[t_i, :] via one-hot @ R^T on the MXU.  Padded rows carry
        # target == c_pad (never matches) and out-of-range user targets never
        # match either -> all-zero row -> zero contribution, no OOB read.
        col = lax.broadcasted_iota(jnp.int32, s.shape, 1)
        onehot = (col == tgt_ref[...]).astype(jnp.float32)  # (tn, c_pad)
        g = jnp.dot(onehot, rT_ref[...], preferred_element_type=jnp.float32)

        nll_part = -jnp.sum(log_p * g)
        gls_part = jnp.sum(_abs_pow(s, p))  # zero padding contributes 0 for p > 0
        _write_partials(out_ref, nll_part, gls_part)

    return kernel


def _make_kernel_gathered_g(n_classes: int, c_pad: int, exponent: float):
    """G = R.T[targets] precomputed in the wrapper; kernel is pure VPU."""
    p = float(exponent)

    def kernel(scores_ref, g_ref, out_ref):
        s = scores_ref[...].astype(jnp.float32)             # (tn, c_pad)
        log_p = _log_softmax(s, n_classes, c_pad)
        # G is zero in padded rows and padded class lanes -> no extra masking.
        nll_part = -jnp.sum(log_p * g_ref[...].astype(jnp.float32))
        gls_part = jnp.sum(_abs_pow(s, p))
        _write_partials(out_ref, nll_part, gls_part)

    return kernel


def backward_correction_logit_squeezing_loss(scores, targets, R,
                                             coefficient: float = 0.1,
                                             exponent: float = 2.0,
                                             block_rows=None,
                                             force_gathered_g: bool = False):
    """Pallas TPU implementation of the module's forward pass.

    scores:  (N, C) float;  targets: (N,) int;  R: (C, C) float.  Returns scalar f32.
    """
    n, c = scores.shape
    coeff_over_p = float(coefficient) / float(exponent)

    c_pad = _round_up(c, 128)
    itemsize_s = jnp.dtype(scores.dtype).itemsize

    # Generation-aware VMEM budget (~48 MiB on v7x's 64 MiB/TC, ~96 MiB on v5e/v6e).
    try:
        vmem_cap = int(pltpu.get_tpu_info().vmem_capacity_bytes)
    except Exception:
        vmem_cap = 64 * 1024 * 1024  # conservative fallback
    vmem_budget = (vmem_cap * 3) // 4

    # Resident R^T (budgeted at 2x for double buffering) only when it fits
    # comfortably; otherwise fall back to the wrapper-gathered G stream.
    rt_bytes = 2 * c_pad * c_pad * 4
    use_resident_rt = (not force_gathered_g) and rt_bytes <= vmem_budget // 3

    # Tile rows so the scores tile is ~2 MiB (amortizes ~0.35 us per-step
    # pipeline overhead) while buffers + in-kernel f32 temporaries fit the budget.
    per_row_bytes = (2 * c_pad * itemsize_s                            # scores x2 buf
                     + (2 * 4 if use_resident_rt else 2 * c_pad * 4)   # tgt col / G x2
                     + 8 * c_pad * 4)                                  # f32 temporaries
    fixed_bytes = (rt_bytes if use_resident_rt else 0) + 2 * 8 * 128 * 4
    budget_rows = max(8, (vmem_budget - fixed_bytes) // per_row_bytes)
    target_rows = max(8, (2 * 1024 * 1024) // (c_pad * itemsize_s))
    tn = min(int(budget_rows), int(target_rows), _round_up(n, 8))
    if block_rows is not None:
        tn = min(tn, int(block_rows))
    tn = max(8, (tn // 8) * 8)

    n_pad = _round_up(n, tn)
    nb = n_pad // tn

    # Zero-pad (padding must be 0 so |0|^p contributes nothing to the GLS sum);
    # skip the copy entirely when shapes already conform.
    if n_pad == n and c_pad == c:
        scores_p = scores
    else:
        scores_p = jnp.pad(scores, ((0, n_pad - n), (0, c_pad - c)))

    vmem_limit = int(min(max(tn * per_row_bytes + fixed_bytes, 16 * 1024 * 1024),
                         vmem_budget))

    if use_resident_rt:
        tgt_col = jnp.full((n_pad, 1), c_pad, dtype=jnp.int32)
        tgt_col = tgt_col.at[:n, 0].set(targets.astype(jnp.int32))
        rT = R.T.astype(jnp.float32)
        rT_p = rT if c_pad == c else jnp.pad(rT, ((0, c_pad - c), (0, c_pad - c)))

        kernel = _make_kernel_resident_rt(c, c_pad, float(exponent))
        grid_spec = pltpu.PrefetchScalarGridSpec(
            num_scalar_prefetch=0,
            grid=(nb,),
            in_specs=[
                pl.BlockSpec((tn, 1), lambda i: (i, 0)),           # target column
                pl.BlockSpec((tn, c_pad), lambda i: (i, 0)),       # scores tiles
                pl.BlockSpec((c_pad, c_pad), lambda i: (0, 0)),    # R^T (constant block)
            ],
            out_specs=pl.BlockSpec((1, 8, 128), lambda i: (i, 0, 0)),
        )
        operands = (tgt_col, scores_p, rT_p)
    else:
        # Large-C fallback: gather only the needed rows of R^T once in the wrapper.
        g = jnp.take(R.astype(jnp.float32).T,
                     jnp.clip(targets.astype(jnp.int32), 0, c - 1), axis=0)
        if n_pad == n and c_pad == c:
            g_p = g
        else:
            g_p = jnp.pad(g, ((0, n_pad - n), (0, c_pad - c)))

        kernel = _make_kernel_gathered_g(c, c_pad, float(exponent))
        grid_spec = pltpu.PrefetchScalarGridSpec(
            num_scalar_prefetch=0,
            grid=(nb,),
            in_specs=[
                pl.BlockSpec((tn, c_pad), lambda i: (i, 0)),       # scores tiles
                pl.BlockSpec((tn, c_pad), lambda i: (i, 0)),       # G tiles
            ],
            out_specs=pl.BlockSpec((1, 8, 128), lambda i: (i, 0, 0)),
        )
        operands = (scores_p, g_p)

    partials = pl.pallas_call(
        kernel,
        out_shape=jax.ShapeDtypeStruct((nb, 8, 128), jnp.float32),
        grid_spec=grid_spec,
        compiler_params=pltpu.CompilerParams(
            dimension_semantics=("parallel",),
            vmem_limit_bytes=vmem_limit),
    )(*operands)

    nll = jnp.sum(partials[:, 0, 0]) / jnp.float32(n)
    gls = jnp.sum(partials[:, 0, 1]) / jnp.float32(n * c)
    return nll + jnp.float32(coeff_over_p) * gls


def _reference(scores, targets, R, coefficient=0.1, exponent=2.0):
    """Plain-JAX reference mirroring the PyTorch forward."""
    log_p = jax.nn.log_softmax(scores.astype(jnp.float32), axis=1)
    rlog_p = jnp.dot(log_p, R.astype(jnp.float32),
                     precision=lax.Precision.HIGHEST)
    nll = -jnp.mean(rlog_p[jnp.arange(scores.shape[0]), targets])
    gls = jnp.mean(jnp.abs(scores.astype(jnp.float32)) ** exponent)
    return nll + (coefficient / exponent) * gls


if __name__ == "__main__":
    key = jax.random.PRNGKey(0)
    k_s, k_r, k_t = jax.random.split(key, 3)

    # Small shapes: N not a multiple of the block, C not a multiple of 128, so
    # row- and class-padding paths are exercised; block_rows=8 forces a
    # multi-step grid with parallel partial sums.
    N, C = 20, 32
    coefficient, exponent = 0.1, 2.0

    scores = jax.random.normal(k_s, (N, C), dtype=jnp.float32)
    targets = jax.random.randint(k_t, (N,), 0, C, dtype=jnp.int32)

    # Deterministic synthetic backward-correction matrix R (row-stochastic),
    # standing in for WeakLabelManager.R.
    r_logits = jax.random.normal(k_r, (C, C), dtype=jnp.float32)
    R = jax.nn.softmax(r_logits, axis=1)

    ref = jax.block_until_ready(
        _reference(scores, targets, R, coefficient, exponent))

    # Path 1: VMEM-resident R^T + one-hot MXU select (default for moderate C).
    loss = jax.block_until_ready(
        backward_correction_logit_squeezing_loss(
            scores, targets, R, coefficient=coefficient, exponent=exponent,
            block_rows=8))
    assert jnp.allclose(loss, ref, rtol=1e-4, atol=1e-4), (loss, ref)

    # Path 2: wrapper-gathered G rows (the large-C fallback), same semantics.
    loss_g = jax.block_until_ready(
        backward_correction_logit_squeezing_loss(
            scores, targets, R, coefficient=coefficient, exponent=exponent,
            block_rows=8, force_gathered_g=True))
    assert jnp.allclose(loss_g, ref, rtol=1e-4, atol=1e-4), (loss_g, ref)

    print("KERNEL_OK")
</pallas_src>

<mosaic_0001>
module attributes {stable_mosaic.version = 11 : i64} {
  func.func @kernel(%arg0: i32, %arg1: memref<8x1xi32, #tpu.memory_space<vmem>>, %arg2: memref<8x128xf32, #tpu.memory_space<vmem>>, %arg3: memref<128x128xf32, #tpu.memory_space<vmem>>, %arg4: memref<1x8x128xf32, #tpu.memory_space<vmem>>) attributes {dimension_semantics = [#tpu.dimension_semantics<parallel>], iteration_bounds = array<i64: 3>, scalar_prefetch = 0 : i64, scratch_operands = 0 : i64, tpu.core_type = #tpu.core_type<tc>, window_params = [{transform_indices = @transform_0, window_bounds = array<i64: 8, 1>}, {transform_indices = @transform_1, window_bounds = array<i64: 8, 128>}, {pipeline_mode = #tpu.pipeline_mode<synchronous>, transform_indices = @transform_2, window_bounds = array<i64: 128, 128>}, {transform_indices = @transform_3, window_bounds = array<i64: 1, 8, 128>}]} {
    %c0 = arith.constant 0 : index
    %c0_0 = arith.constant 0 : index
    %0 = vector.load %arg2[%c0, %c0_0] : memref<8x128xf32, #tpu.memory_space<vmem>>, vector<8x128xf32>
    %1 = tpu.iota {dimensions = array<i32: 1>} : vector<8x128xi32>
    %c32_i32 = arith.constant 32 : i32
    %2 = vector.broadcast %c32_i32 : i32 to vector<8x128xi32>
    %3 = arith.cmpi slt, %1, %2 : vector<8x128xi32>
    %cst = arith.constant -1.000000e+30 : f32
    %4 = vector.broadcast %cst : f32 to vector<8x128xf32>
    %5 = arith.select %3, %0, %4 : vector<8x128xi1>, vector<8x128xf32>
    %cst_1 = arith.constant dense<0xFF800000> : vector<8xf32>
    %6 = vector.multi_reduction <maximumf>, %5, %cst_1 [1] : vector<8x128xf32> to vector<8xf32>
    %7 = vector.shape_cast %6 : vector<8xf32> to vector<8x1xf32>
    %8 = vector.broadcast %7 : vector<8x1xf32> to vector<8x128xf32>
    %9 = arith.subf %5, %8 : vector<8x128xf32>
    %10 = math.exp %9 : vector<8x128xf32>
    %cst_2 = arith.constant dense<0.000000e+00> : vector<8xf32>
    %11 = vector.multi_reduction <add>, %10, %cst_2 [1] : vector<8x128xf32> to vector<8xf32>
    %12 = vector.shape_cast %11 : vector<8xf32> to vector<8x1xf32>
    %13 = math.log %12 : vector<8x1xf32>
    %14 = vector.broadcast %13 : vector<8x1xf32> to vector<8x128xf32>
    %15 = arith.subf %9, %14 : vector<8x128xf32>
    %16 = tpu.iota {dimensions = array<i32: 1>} : vector<8x128xi32>
    %c0_3 = arith.constant 0 : index
    %c0_4 = arith.constant 0 : index
    %17 = vector.load %arg1[%c0_3, %c0_4] : memref<8x1xi32, #tpu.memory_space<vmem>>, vector<8x1xi32>
    %18 = vector.broadcast %17 : vector<8x1xi32> to vector<8x128xi32>
    %19 = arith.cmpi eq, %16, %18 : vector<8x128xi32>
    %20 = arith.extui %19 : vector<8x128xi1> to vector<8x128xi32>
    %21 = arith.sitofp %20 : vector<8x128xi32> to vector<8x128xf32>
    %c0_5 = arith.constant 0 : index
    %c0_6 = arith.constant 0 : index
    %22 = vector.load %arg3[%c0_5, %c0_6] : memref<128x128xf32, #tpu.memory_space<vmem>>, vector<128x128xf32>
    %cst_7 = arith.constant dense<0.000000e+00> : vector<8x128xf32>
    %23 = tpu.matmul %21, %22, %cst_7 {dimension_numbers = #tpu.dot_dimension_numbers<[1], [0], [0], [1], [0, 0, 1, 1], [], []>} : vector<8x128xf32>, vector<128x128xf32>, vector<8x128xf32> -> vector<8x128xf32>
    %24 = arith.mulf %15, %23 : vector<8x128xf32>
    %25 = vector.shape_cast %24 : vector<8x128xf32> to vector<1x8x128xf32>
    %cst_8 = arith.constant dense<0.000000e+00> : vector<1xf32>
    %26 = vector.multi_reduction <add>, %25, %cst_8 [1, 2] : vector<1x8x128xf32> to vector<1xf32>
    %27 = vector.shape_cast %26 : vector<1xf32> to vector<1x1x1xf32>
    %28 = vector.extract %27[0, 0, 0] : f32 from vector<1x1x1xf32>
    %cst_9 = arith.constant 0.000000e+00 : f32
    %29 = arith.subf %cst_9, %28 : f32
    %30 = arith.mulf %0, %0 : vector<8x128xf32>
    %31 = vector.shape_cast %30 : vector<8x128xf32> to vector<1x8x128xf32>
    %cst_10 = arith.constant dense<0.000000e+00> : vector<1xf32>
    %32 = vector.multi_reduction <add>, %31, %cst_10 [1, 2] : vector<1x8x128xf32> to vector<1xf32>
    %33 = vector.shape_cast %32 : vector<1xf32> to vector<1x1x1xf32>
    %34 = vector.extract %33[0, 0, 0] : f32 from vector<1x1x1xf32>
    %35 = tpu.iota {dimensions = array<i32: 2>} : vector<1x8x128xi32>
    %36 = tpu.iota {dimensions = array<i32: 1>} : vector<1x8x128xi32>
    %c0_i32 = arith.constant 0 : i32
    %37 = vector.broadcast %c0_i32 : i32 to vector<1x8x128xi32>
    %38 = arith.cmpi eq, %36, %37 : vector<1x8x128xi32>
    %c0_i32_11 = arith.constant 0 : i32
    %39 = vector.broadcast %c0_i32_11 : i32 to vector<1x8x128xi32>
    %40 = arith.cmpi eq, %35, %39 : vector<1x8x128xi32>
    %41 = arith.andi %38, %40 : vector<1x8x128xi1>
    %c0_i32_12 = arith.constant 0 : i32
    %42 = vector.broadcast %c0_i32_12 : i32 to vector<1x8x128xi32>
    %43 = arith.cmpi eq, %36, %42 : vector<1x8x128xi32>
    %c1_i32 = arith.constant 1 : i32
    %44 = vector.broadcast %c1_i32 : i32 to vector<1x8x128xi32>
    %45 = arith.cmpi eq, %35, %44 : vector<1x8x128xi32>
    %46 = arith.andi %43, %45 : vector<1x8x128xi1>
    %cst_13 = arith.constant 0.000000e+00 : f32
    %47 = vector.broadcast %34 : f32 to vector<1x8x128xf32>
    %48 = vector.broadcast %cst_13 : f32 to vector<1x8x128xf32>
    %49 = arith.select %46, %47, %48 : vector<1x8x128xi1>, vector<1x8x128xf32>
    %50 = vector.broadcast %29 : f32 to vector<1x8x128xf32>
    %51 = arith.select %41, %50, %49 : vector<1x8x128xi1>, vector<1x8x128xf32>
    %c0_14 = arith.constant 0 : index
    %c0_15 = arith.constant 0 : index
    %c0_16 = arith.constant 0 : index
    %52 = vector.load %arg4[%c0_14, %c0_15, %c0_16] : memref<1x8x128xf32, #tpu.memory_space<vmem>>, vector<1x8x128xf32>
    tpu.vector_store %arg4[%c0_14, %c0_15, %c0_16], %51 {strides = array<i32>} : memref<1x8x128xf32, #tpu.memory_space<vmem>>, vector<1x8x128xf32>,
    return
  }
  func.func @transform_0(%arg0: i32) -> (i32, i32) {
    %c0_i32 = arith.constant 0 : i32
    %c0_i32_0 = arith.constant 0 : i32
    return %arg0, %c0_i32 : i32, i32
  }
  func.func @transform_1(%arg0: i32) -> (i32, i32) {
    %c0_i32 = arith.constant 0 : i32
    %c0_i32_0 = arith.constant 0 : i32
    return %arg0, %c0_i32 : i32, i32
  }
  func.func @transform_2(%arg0: i32) -> (i32, i32) {
    %c0_i32 = arith.constant 0 : i32
    %c0_i32_0 = arith.constant 0 : i32
    %c0_i32_1 = arith.constant 0 : i32
    return %c0_i32, %c0_i32_0 : i32, i32
  }
  func.func @transform_3(%arg0: i32) -> (i32, i32, i32) {
    %c0_i32 = arith.constant 0 : i32
    %c0_i32_0 = arith.constant 0 : i32
    %c0_i32_1 = arith.constant 0 : i32
    return %arg0, %c0_i32, %c0_i32_0 : i32, i32, i32
  }
}

</mosaic_0001>

<llo_original>
// kernel: tpu_custom_call.1
$region0: #{tpu_custom_call.1}
  #allocation0 [shape = 'u32[]', space=smem, size = 0x4, offset = 0x4, fixed_abs, tag = 'smem constant byte address 0x4 - core index']
  #allocation1 [shape = 'u32[72,128]{1,0:T(1,128)}', space=vmem, size = 0x9000, scoped, tag = 'internal scratch']
  %s0 = inlined_call_operand.vmem [shape: s32[24,1], index: 0, kind: input, shape index: {}]
  %s1 = inlined_call_operand.vmem [shape: f32[24,128], index: 1, kind: input, shape index: {}]
  %s2 = inlined_call_operand.hbm [shape: f32[128,128], index: 2, kind: input, shape index: {}]
  %s3 = inlined_call_operand.hbm [shape: f32[3,8,128], index: 3, kind: output, shape index: {}]
  %s4 = sld [smem:[#allocation0]]
  $region49: #{tpu_custom_call.1} parent=0
    _
  %s6 = ssub.s32 1, %s4
  %s7 = scalar_select 0, %s6, %s4
  $region1: #{tpu_custom_call.1} parent=0
    #allocation2 [shape = 'u8[65536]{0}', space=vmem, size = 0x10000, scoped, tag = 'input window, operand 2, single buffered']
    #allocation3 [shape = 's32[2]{0}', space=sflag, size = 0x8, scoped, tag = 'scoped memory for tpu_custom_call.1']
    #allocation4 [shape = 's32[2]{0}', space=sflag, size = 0x8, scoped, tag = 'scoped memory for tpu_custom_call.1']
    #allocation5 [shape = 'u8[8192]{0}', space=vmem, size = 0x2000, scoped, tag = 'output window, operand 0']
    %8 = vsyncpa [#allocation3], 0
    %9 = vsyncpa [#allocation4], 0
    %s10 = scalar_lea.sflag [#allocation4], 1
    %11 = vsyncpa %s10, 0
    loop: start=0, step=1, limit=5
    $region2: #{tpu_custom_call.1} parent=1 // loop_pre_header
      _
    $region3: #{tpu_custom_call.1} parent=1 // loop_header
      %s13 = sphi 0, %s17
      %p14 = scmp.ge.s32.totalorder %s13, 5
      %s23 = sphi 0, %s25
      %s26 = sphi 0, %s23
      %s27 = sphi 0, %s26
      %s43 = sphi 0, %s27
      %s49 = sphi 0, %s51
      %s52 = sphi 0, %s49
      %s53 = sphi 0, %s52
      %s69 = sphi 0, %s53
      %s73 = sphi 0, %s73
      %s75 = sphi 0, %s73
      %s76 = sphi 0, %s75
      %s90 = sphi 0, %s76
      %s96 = sphi 0, %s98
      %s99 = sphi 0, %s96
      %s100 = sphi 0, %s99
      %s116 = sphi 0, %s100
    $region4: #{tpu_custom_call.1} parent=1 // loop_header_branch
      %16 = sbr.rel (%p14) target = $region8
    $region5: #{tpu_custom_call.1} parent=1 // loop_body
      %s18 = ssub.s32 %s13, 1
      %s19 = ssub.s32 %s13, 2
      %s20 = sadd.s32 %s13, 1
      %s21 = ssub.s32 %s13, %s20
      %p22 = scmp.eq.s32.totalorder %s21, 0
      %s24 = sadd.s32 %s23, 1
      %s25 = scalar_select %p22, %s23, %s24
      %p28 = pneg %p22
      %p29 = scmp.eq.s32.totalorder %s13, 2
      %p30 = por %p28, %p29
      %p31 = scmp.ne.s32.totalorder %s23, %s26
      %p32 = scmp.eq.s32.totalorder %s13, 0
      %p33 = por %p31, %p32
      %p34 = scmp.ne.s32.totalorder %s23, %s26
      %p35 = scmp.eq.s32.totalorder %s18, 2
      %p36 = por %p34, %p35
      %p37 = scmp.ne.s32.totalorder %s26, %s27
      %p38 = scmp.eq.s32.totalorder %s18, 0
      %p39 = por %p37, %p38
      %p40 = scmp.ne.s32.totalorder %s26, %s27
      %p41 = scmp.eq.s32.totalorder %s19, 2
      %p42 = por %p40, %p41
      %p44 = scmp.ne.s32.totalorder %s27, %s43
      %p45 = scmp.eq.s32.totalorder %s19, 0
      %p46 = por %p44, %p45
      %s47 = ssub.s32 %s13, %s20
      %p48 = scmp.eq.s32.totalorder %s47, 0
      %s50 = sadd.s32 %s49, 1
      %s51 = scalar_select %p48, %s49, %s50
      %p54 = pneg %p48
      %p55 = scmp.eq.s32.totalorder %s13, 2
      %p56 = por %p54, %p55
      %p57 = scmp.ne.s32.totalorder %s49, %s52
      %p58 = scmp.eq.s32.totalorder %s13, 0
      %p59 = por %p57, %p58
      %p60 = scmp.ne.s32.totalorder %s49, %s52
      %p61 = scmp.eq.s32.totalorder %s18, 2
      %p62 = por %p60, %p61
      %p63 = scmp.ne.s32.totalorder %s52, %s53
      %p64 = scmp.eq.s32.totalorder %s18, 0
      %p65 = por %p63, %p64
      %p66 = scmp.ne.s32.totalorder %s52, %s53
      %p67 = scmp.eq.s32.totalorder %s19, 2
      %p68 = por %p66, %p67
      %p70 = scmp.ne.s32.totalorder %s53, %s69
      %p71 = scmp.eq.s32.totalorder %s19, 0
      %p72 = por %p70, %p71
      %s74 = sadd.s32 %s73, 1
      %p77 = scmp.eq.s32.totalorder %s13, 2
      %p78 = scmp.ne.s32.totalorder %s73, %s75
      %p79 = scmp.eq.s32.totalorder %s13, 0
      %p80 = por %p78, %p79
      %p81 = scmp.ne.s32.totalorder %s73, %s75
      %p82 = scmp.eq.s32.totalorder %s18, 2
      %p83 = por %p81, %p82
      %p84 = scmp.ne.s32.totalorder %s75, %s76
      %p85 = scmp.eq.s32.totalorder %s18, 0
      %p86 = por %p84, %p85
      %p87 = scmp.ne.s32.totalorder %s75, %s76
      %p88 = scmp.eq.s32.totalorder %s19, 2
      %p89 = por %p87, %p88
      %p91 = scmp.ne.s32.totalorder %s76, %s90
      %p92 = scmp.eq.s32.totalorder %s19, 0
      %p93 = por %p91, %p92
      %s94 = ssub.s32 %s13, %s20
      %p95 = scmp.eq.s32.totalorder %s94, 0
      %s97 = sadd.s32 %s96, 1
      %s98 = scalar_select %p95, %s96, %s97
      %p101 = pneg %p95
      %p102 = scmp.eq.s32.totalorder %s13, 2
      %p103 = por %p101, %p102
      %p104 = scmp.ne.s32.totalorder %s96, %s99
      %p105 = scmp.eq.s32.totalorder %s13, 0
      %p106 = por %p104, %p105
      %p107 = scmp.ne.s32.totalorder %s96, %s99
      %p108 = scmp.eq.s32.totalorder %s18, 2
      %p109 = por %p107, %p108
      %p110 = scmp.ne.s32.totalorder %s99, %s100
      %p111 = scmp.eq.s32.totalorder %s18, 0
      %p112 = por %p110, %p111
      %p113 = scmp.ne.s32.totalorder %s99, %s100
      %p114 = scmp.eq.s32.totalorder %s19, 2
      %p115 = por %p113, %p114
      %p117 = scmp.ne.s32.totalorder %s100, %s116
      %p118 = scmp.eq.s32.totalorder %s19, 0
      %p119 = por %p117, %p118
      %p120 = scmp.le.s32.totalorder 1, %s13
      %p121 = scmp.lt.s32.totalorder %s13, 4
      %p122 = pnand %p120, %p121
      %p123 = pneg %p122
      // Predicated region
      $region9: #{tpu_custom_call.1} parent=5 // pred_check
        _
      $region10: #{tpu_custom_call.1} parent=5 // pred_check_branch
        %125 = sbr.rel (%p122) target = $region12
      $region11: #{tpu_custom_call.1} parent=5 // pred_region
        %s126 = ssub.s32 %s13, 1
        // Predicated region
        $region13: #{tpu_custom_call.1} parent=11 // pred_check
          %p127 = pneg %p86
        $region14: #{tpu_custom_call.1} parent=11 // pred_check_branch
          %129 = sbr.rel (%p127) target = $region16
        $region15: #{tpu_custom_call.1} parent=11 // pred_region
          %131 = vsyncadd [#allocation3], 0
          %s132 = sshll.u32 %s2, 4
          %s133 = int_to_ptr.hbm [resolvable:$true] %s132
          %s134 = sshll.u32 [#allocation2], 4
          %s135 = int_to_ptr.vmem [resolvable:$true] %s134
          %140 = dma.hbm_to_vmem [thread:$0]  %s133, 2048, %s135, [#allocation3], 128, 128, 8
        $region16: #{tpu_custom_call.1} parent=11 // pred_fallthru
          _
      $region12: #{tpu_custom_call.1} parent=5 // pred_fallthru
        _
      %p141 = scmp.lt.s32.totalorder %s13, 3
      // Predicated region
      $region17: #{tpu_custom_call.1} parent=5 // pred_check
        %p142 = pneg %p141
      $region18: #{tpu_custom_call.1} parent=5 // pred_check_branch
        %144 = sbr.rel (%p142) target = $region20
      $region19: #{tpu_custom_call.1} parent=5 // pred_region
        // Predicated region
        $region21: #{tpu_custom_call.1} parent=19 // pred_check
          %p145 = pneg %p33
        $region22: #{tpu_custom_call.1} parent=19 // pred_check_branch
          %147 = sbr.rel (%p145) target = $region24
        $region23: #{tpu_custom_call.1} parent=19 // pred_region
          %p148 = scmp.lt.s32.totalorder %s13, 2
          %s149 = scalar_select %p148, %s13, 2
          %s150 = smul.addr %s149, 8
          %s151 = scalar_lea.vmem %s0, %s150
        $region24: #{tpu_custom_call.1} parent=19 // pred_fallthru
          _
        // Predicated region
        $region25: #{tpu_custom_call.1} parent=19 // pred_check
          %p152 = pneg %p59
        $region26: #{tpu_custom_call.1} parent=19 // pred_check_branch
          %154 = sbr.rel (%p152) target = $region28
        $region27: #{tpu_custom_call.1} parent=19 // pred_region
          %p155 = scmp.lt.s32.totalorder %s13, 2
          %s156 = scalar_select %p155, %s13, 2
          %s157 = smul.addr %s156, 8
          %s158 = scalar_lea.vmem %s1, %s157
        $region28: #{tpu_custom_call.1} parent=19 // pred_fallthru
          _
      $region20: #{tpu_custom_call.1} parent=5 // pred_fallthru
        _
      %p159 = scmp.le.s32.totalorder 1, %s13
      %p160 = scmp.lt.s32.totalorder %s13, 4
      %p161 = pnand %p159, %p160
      %p162 = pneg %p161
      // Predicated region
      $region29: #{tpu_custom_call.1} parent=5 // pred_check
        _
      $region30: #{tpu_custom_call.1} parent=5 // pred_check_branch
        %164 = sbr.rel (%p161) target = $region32
      $region31: #{tpu_custom_call.1} parent=5 // pred_region
        %s165 = ssub.s32 %s13, 1
        // Predicated region
        $region33: #{tpu_custom_call.1} parent=31 // pred_check
          %p166 = pneg %p86
        $region34: #{tpu_custom_call.1} parent=31 // pred_check_branch
          %168 = sbr.rel (%p166) target = $region36
        $region35: #{tpu_custom_call.1} parent=31 // pred_region
          %170 = dma.done [#allocation3], 2048
        $region36: #{tpu_custom_call.1} parent=31 // pred_fallthru
          _
        %p171 = scmp.lt.s32.totalorder %s18, 2
        %s172 = scalar_select %p171, %s18, 2
        %s173 = smul.addr %s172, 8
        %s174 = scalar_lea.vmem %s0, %s173
        %p175 = pneg %p39
        %p176 = pneg %p36
        %p177 = scmp.lt.s32.totalorder %s18, 2
        %s178 = scalar_select %p177, %s18, 2
        %s179 = smul.addr %s178, 8
        %s180 = scalar_lea.vmem %s1, %s179
        %p181 = pneg %p65
        %p182 = pneg %p62
        %p183 = pneg %p86
        %p184 = pneg %p83
        %p185 = pneg %p112
        %p186 = pneg %p109
        %s187 = sand.u32 %s99, 1
        %s188 = scalar_lea.sflag [#allocation4], %s187
        %s189 = sand.u32 %s99, 1
        %s190 = smul.addr %s189, 8
        %s191 = scalar_lea.vmem [#allocation5], %s190
        %p192 = scmp.lt.s32.totalorder %s18, 2
        %s193 = scalar_select %p192, %s18, 2
        %s194 = smul.addr %s193, 8
        %s195 = scalar_lea.vmem %s0, %s194
        %p196 = scmp.lt.s32.totalorder %s18, 2
        %s197 = scalar_select %p196, %s18, 2
        %s198 = smul.addr %s197, 8
        %s199 = scalar_lea.vmem %s1, %s198
        %v200 = vld [vmem:[%s199] sm:$0xff]
        %v201 = vlaneseq
        %v202 = vand.u32 %v201, 127
        %vm203 = vcmp.lt.s32.totalorder %v202, 32
        %v204 = vsel %vm203, %v200, -1e+30
        %205 = vmax.xlane.f32.xlu0 %v204
        %v206 = vpop.xlane.xlu0 %205
        %v207 = vsub.f32 %v204, %v206
        %v208 = vmul.f32 %v207, 1.442695
        %v209 = vpow.pop %v208
        %210 = vadd.xlane.f32.xlu0 %v209
        %v211 = vpop.xlane.xlu0 %210
        %v212 = vlog2.pop %v211
        %v213 = vmul.f32 %v212, 0.6931472
        %v214 = vsub.f32 %v207, %v213
        %v215 = vld [vmem:[%s195] sm:$0xff]
        %216 = vset.pattern.permute.xlu0 0
        %217 = vperm.xlu0 %216, %v215
        %v218 = vpop.permute.xlu0 %217
        %vm219 = vcmp.eq.s32.totalorder %v202, %v218
        %v220 = vsel %vm219, 1, 0
        %v221 = vcvt.s32.f32 %v220
        %v222 = vld [vmem:[#allocation2] sm:$0xff]
        %v223 = vld [vmem:[#allocation2 + $0x8] sm:$0xff]
        %v224 = vld [vmem:[#allocation2 + $0x10] sm:$0xff]
        %v225 = vld [vmem:[#allocation2 + $0x18] sm:$0xff]
        %v226 = vld [vmem:[#allocation2 + $0x20] sm:$0xff]
        %v227 = vld [vmem:[#allocation2 + $0x28] sm:$0xff]
        %v228 = vld [vmem:[#allocation2 + $0x30] sm:$0xff]
        %v229 = vld [vmem:[#allocation2 + $0x38] sm:$0xff]
        %v230 = vld [vmem:[#allocation2 + $0x40] sm:$0xff]
        %v231 = vld [vmem:[#allocation2 + $0x48] sm:$0xff]
        %v232 = vld [vmem:[#allocation2 + $0x50] sm:$0xff]
        %v233 = vld [vmem:[#allocation2 + $0x58] sm:$0xff]
        %v234 = vld [vmem:[#allocation2 + $0x60] sm:$0xff]
        %v235 = vld [vmem:[#allocation2 + $0x68] sm:$0xff]
        %v236 = vld [vmem:[#allocation2 + $0x70] sm:$0xff]
        %v237 = vld [vmem:[#allocation2 + $0x78] sm:$0xff]
        %238 = vmatpush.msra.mxu0 %v237
        %239 = vmatpush.msra.mxu0 %v236
        %240 = vmatpush.msra.mxu0 %v235
        %241 = vmatpush.msra.mxu0 %v234
        %242 = vmatpush.msra.mxu0 %v233
        %243 = vmatpush.msra.mxu0 %v232
        %244 = vmatpush.msra.mxu0 %v231
        %245 = vmatpush.msra.mxu0 %v230
        %246 = vmatpush.msra.mxu0 %v229
        %247 = vmatpush.msra.mxu0 %v228
        %248 = vmatpush.msra.mxu0 %v227
        %249 = vmatpush.msra.mxu0 %v226
        %250 = vmatpush.msra.mxu0 %v225
        %251 = vmatpush.msra.mxu0 %v224
        %252 = vmatpush.msra.mxu0 %v223
        %253 = vmatpush.msra.mxu0 %v222
        %254 = vmatmul.f32.gmra.mxu0 %v221
        %v255 = vpop.f32.mrf.mxu0
        %v256 = vadd.f32 0.0, %v255
        %257 = vdwg.mxu0
        %v258 = vmul.f32 %v214, %v256
        %259 = vadd.xlane.f32.xlu0 %v258
        %v260 = vpop.xlane.xlu0 %259
        %v261 = vrot.slane %v260, 4
        %v262 = vadd.f32 %v260, %v261
        %v263 = vrot.slane %v262, 2
        %v264 = vadd.f32 %v262, %v263
        %v265 = vrot.slane %v264, 1
        %v266 = vadd.f32 %v264, %v265
        %s267 = vtos %v266
        %s268 = ssub.f32 0.0, %s267
        %v269 = vmul.f32 %v200, %v200
        %270 = vadd.xlane.f32.xlu0 %v269
        %v271 = vpop.xlane.xlu0 %270
        %v272 = vrot.slane %v271, 4
        %v273 = vadd.f32 %v271, %v272
        %v274 = vrot.slane %v273, 2
        %v275 = vadd.f32 %v273, %v274
        %v276 = vrot.slane %v275, 1
        %v277 = vadd.f32 %v275, %v276
        %s278 = vtos %v277
        %v279 = vlaneseq
        %v280 = vshrl.u32 %v279, 7
        %vm281 = vcmp.eq.s32.totalorder %v280, 0
        %vm282 = vcmp.eq.s32.totalorder %v202, 0
        %vm283 = vmand %vm281, %vm282
        %vm284 = vcmp.eq.s32.totalorder %v202, 1
        %vm285 = vmand %vm281, %vm284
        %v286 = vstv %s278
        %v287 = vsel %vm285, %v286, 0.0
        %v288 = vstv %s268
        %v289 = vsel %vm283, %v288, %v287
        %290 = vst [vmem:[%s191] sm:$0xff] %v289
        %s291 = sand.u32 %s99, 1
        %s292 = scalar_lea.sflag [#allocation4], %s291
        %s293 = sand.u32 %s99, 1
        %s294 = smul.addr %s293, 8
        %s295 = scalar_lea.vmem [#allocation5], %s294
        // Predicated region
        $region37: #{tpu_custom_call.1} parent=31 // pred_check
          %p296 = pneg %p109
        $region38: #{tpu_custom_call.1} parent=31 // pred_check_branch
          %298 = sbr.rel (%p296) target = $region40
        $region39: #{tpu_custom_call.1} parent=31 // pred_region
          %300 = vsyncadd %s292, 0
          %s301 = smul.addr %s18, 8
          %s302 = scalar_lea.hbm %s3, %s301
          %s304 = sshll.u32 %s295, 4
          %s305 = int_to_ptr.vmem [resolvable:$true] %s304
          %s306 = sshll.u32 %s302, 4
          %s307 = int_to_ptr.hbm [resolvable:$true] %s306
          %309 = dma.vmem_to_hbm [thread:$0]  %s305, 128, %s307, %s292
        $region40: #{tpu_custom_call.1} parent=31 // pred_fallthru
          _
      $region32: #{tpu_custom_call.1} parent=5 // pred_fallthru
        _
      %p310 = scmp.le.s32.totalorder 2, %s13
      // Predicated region
      $region41: #{tpu_custom_call.1} parent=5 // pred_check
        %p311 = pneg %p310
      $region42: #{tpu_custom_call.1} parent=5 // pred_check_branch
        %313 = sbr.rel (%p311) target = $region44
      $region43: #{tpu_custom_call.1} parent=5 // pred_region
        %s314 = ssub.s32 %s13, 2
        // Predicated region
        $region45: #{tpu_custom_call.1} parent=43 // pred_check
          %p315 = pneg %p115
        $region46: #{tpu_custom_call.1} parent=43 // pred_check_branch
          %317 = sbr.rel (%p315) target = $region48
        $region47: #{tpu_custom_call.1} parent=43 // pred_region
          %s318 = sand.u32 %s100, 1
          %s319 = scalar_lea.sflag [#allocation4], %s318
          %s320 = sand.u32 %s100, 1
          %s321 = smul.addr %s320, 8
          %s322 = scalar_lea.vmem [#allocation5], %s321
          %324 = dma.done %s319, 128
        $region48: #{tpu_custom_call.1} parent=43 // pred_fallthru
          _
      $region44: #{tpu_custom_call.1} parent=5 // pred_fallthru
        _
    $region6: #{tpu_custom_call.1} parent=1 // loop_footer
      %s17 = sadd.s32 1, %s13
    $region7: #{tpu_custom_call.1} parent=1 // loop_footer_branch
      %12 = sbr.rel target = $region3
    $region8: #{tpu_custom_call.1} parent=1 // loop_exit
      _
    %325 = vsyncpa [#allocation3], 1
    %s326 = scalar_lea.sflag [#allocation3], 1
    %327 = vsyncpa %s326, 1
    %328 = vsyncpa [#allocation4], 1
    %s329 = scalar_lea.sflag [#allocation4], 1
    %330 = vsyncpa %s329, 1

</llo_original>
